<compile_context>
chip_gen: v7x
topology: tpu7x:2x2x1
jax: 0.10.0
libtpu: 0.0.40
codegen_flags: <defaults>
</compile_context>

<pallas_src>
import functools

import jax
import jax.numpy as jnp
from jax.experimental import pallas as pl
from jax.experimental.pallas import tpu as pltpu


def _round_up(n, m):
    return ((n + m - 1) // m) * m


def _adapter_kernel_fused(scale, add_residual, x_ref, wd_ref, bd_ref, wu_ref,
                          bu_ref, o_ref):
    """Common path: residual is x itself (or no residual). x is streamed once."""
    x = x_ref[...]
    # down = relu(x @ Wd^T + bd): MXU matmul in x's dtype, f32 accumulation.
    down = jnp.dot(x, wd_ref[...], preferred_element_type=jnp.float32)
    down = jnp.maximum(down + bd_ref[...], 0.0).astype(x.dtype)
    # TODO(synk): training-mode dropout (pltpu.prng_seed/prng_random_bits) not
    # implemented; eval-mode dropout is identity, which is what we implement.
    # up = (down @ Wu^T + bu) * scale; epilogue in activation dtype.
    up = jnp.dot(down, wu_ref[...], preferred_element_type=jnp.float32)
    up = ((up + bu_ref[...]) * scale).astype(x.dtype)
    if add_residual:
        up = up + x
    o_ref[...] = up.astype(o_ref.dtype)


def _adapter_kernel_sep_res(scale, x_ref, res_ref, wd_ref, bd_ref, wu_ref,
                            bu_ref, o_ref):
    """Path with an explicit residual tensor distinct from x."""
    x = x_ref[...]
    down = jnp.dot(x, wd_ref[...], preferred_element_type=jnp.float32)
    down = jnp.maximum(down + bd_ref[...], 0.0).astype(x.dtype)
    up = jnp.dot(down, wu_ref[...], preferred_element_type=jnp.float32)
    up = ((up + bu_ref[...]) * scale).astype(x.dtype)
    o_ref[...] = (up + res_ref[...]).astype(o_ref.dtype)


def adapter_former_forward(x, w_down, b_down, w_up, b_up, scale=0.1,
                           add_residual=True, residual=None, block_m=512):
    """x: (B, N, D).  w_down: (R, D), w_up: (D, R)  (PyTorch (out, in) layout).

    adapter_layernorm_option='none' and eval-mode dropout assumed.
    TODO(synk): adapter_layernorm_option='in'/'out' (LayerNorm) and a learnable
    scalar scale are not implemented in-kernel; `scale` must be a Python float.
    """
    B, N, D = x.shape
    R = w_down.shape[0]
    M = B * N
    itemsize = jnp.dtype(x.dtype).itemsize

    x2 = x.reshape(M, D)
    separate_residual = bool(add_residual) and (residual is not None)
    res2 = residual.reshape(M, D).astype(x.dtype) if separate_residual else None

    # ---- Row-tile selection (no array padding / output slicing). -----------
    if M <= 8:
        TM = M                                        # exact single block
    else:
        TM = min(block_m, _round_up(M, 8))
        if pl.cdiv(M, TM) < 2 and M >= 16:
            # Keep >= 2 grid steps so both v7x TensorCores get work.
            TM = _round_up(pl.cdiv(M, 2), 8)

    # ---- Generation-aware VMEM budget. --------------------------------------
    n_streams = (2 if separate_residual else 1) + 1   # streamed inputs + output
    w_bytes = (D * R + R * D) * itemsize + (R + D) * itemsize

    def _budget(tm, w_buffers):
        stream = 2 * n_streams * tm * D * itemsize          # double-buffered tiles
        inter = tm * D * 4 + tm * R * 4                     # f32 'up' and 'down'
        return stream + w_buffers * w_bytes + inter

    slack = 8 << 20                                          # Mosaic internal scratch
    try:
        vmem_cap = int(pltpu.get_tpu_info().vmem_capacity_bytes) * 3 // 4
    except Exception:
        vmem_cap = 48 << 20    # safe for v7x's 64 MiB/TC; v5e/v6e have 128 MiB

    while TM > 8 and _budget(TM, 2) + slack > vmem_cap:
        TM = max(8, (TM // 2) // 8 * 8)

    grid_m = pl.cdiv(M, TM)
    vmem_limit = int(min(max(_budget(TM, 2) + slack, 32 << 20), vmem_cap))

    # ---- Parameters: pre-transposed, cast to the activation dtype. ----------
    wd_t = jnp.transpose(w_down).astype(x.dtype)   # (D, R)
    wu_t = jnp.transpose(w_up).astype(x.dtype)     # (R, D)
    bd2 = b_down.reshape(1, R).astype(x.dtype)
    bu2 = b_up.reshape(1, D).astype(x.dtype)

    xres_spec = pl.BlockSpec((TM, D), lambda i: (i, 0))

    if separate_residual:
        kernel = functools.partial(_adapter_kernel_sep_res, float(scale))
        stream_specs = [xres_spec, xres_spec]
        args = (x2, res2, wd_t, bd2, wu_t, bu2)
    else:
        kernel = functools.partial(_adapter_kernel_fused, float(scale),
                                   bool(add_residual))
        stream_specs = [xres_spec]
        args = (x2, wd_t, bd2, wu_t, bu2)

    def _run(single_buffer_weights):
        kw = dict(pipeline_mode=pl.Buffered(1)) if single_buffer_weights else {}
        const_specs = [
            pl.BlockSpec((D, R), lambda i: (0, 0), **kw),   # W_down^T (VMEM resident)
            pl.BlockSpec((1, R), lambda i: (0, 0), **kw),   # b_down
            pl.BlockSpec((R, D), lambda i: (0, 0), **kw),   # W_up^T   (VMEM resident)
            pl.BlockSpec((1, D), lambda i: (0, 0), **kw),   # b_up
        ]
        return pl.pallas_call(
            kernel,
            out_shape=jax.ShapeDtypeStruct((M, D), x.dtype),
            grid_spec=pltpu.PrefetchScalarGridSpec(
                num_scalar_prefetch=0,
                grid=(grid_m,),
                in_specs=stream_specs + const_specs,
                out_specs=pl.BlockSpec((TM, D), lambda i: (i, 0)),
            ),
            compiler_params=pltpu.CompilerParams(
                dimension_semantics=("parallel",),
                vmem_limit_bytes=vmem_limit,
            ),
        )(*args)

    try:
        out = _run(True)
    except Exception:
        # pl.Buffered(1) (single-buffered resident weights) not supported on
        # this jax/Mosaic version; fall back to default double-buffering.
        out = _run(False)

    return out.reshape(B, N, D)


def _reference(x, w_down, b_down, w_up, b_up, scale=0.1,
               add_residual=True, residual=None):
    res = x if residual is None else residual
    down = jnp.maximum(x @ w_down.T + b_down, 0.0)
    up = (down @ w_up.T + b_up) * scale
    return up + res if add_residual else up


if __name__ == "__main__":
    # Small transformer-ish shapes: batch=2, seq=8, d_model=128, bottleneck=64.
    B, N, D, R = 2, 8, 128, 64
    key = jax.random.PRNGKey(0)
    kx, kwd, kwu, kres = jax.random.split(key, 4)

    x = jax.random.normal(kx, (B, N, D), dtype=jnp.float32)

    # Deterministic synthetic parameter init (module __init__ gives shapes).
    # down_proj: kaiming_uniform(a=sqrt(5)) -> U(-1/sqrt(fan_in), 1/sqrt(fan_in)).
    bound = 1.0 / jnp.sqrt(jnp.float32(D))
    w_down = jax.random.uniform(kwd, (R, D), jnp.float32, -bound, bound)
    b_down = jnp.zeros((R,), jnp.float32)
    # up_proj is zero-initialized in 'lora' init; use small random values so the
    # full compute path is exercised (zeros would make out == residual trivially).
    w_up = 0.02 * jax.random.normal(kwu, (D, R), dtype=jnp.float32)
    b_up = jnp.zeros((D,), jnp.float32)

    # 1) Common path: residual = x, add_residual=True.
    out = adapter_former_forward(x, w_down, b_down, w_up, b_up, scale=0.1)
    out = jax.block_until_ready(out)
    ref = _reference(x, w_down, b_down, w_up, b_up, scale=0.1)
    assert out.shape == (B, N, D)
    assert jnp.allclose(out, ref, atol=1e-5, rtol=1e-5)

    # 2) No residual.
    out_nr = adapter_former_forward(x, w_down, b_down, w_up, b_up, scale=0.1,
                                    add_residual=False)
    out_nr = jax.block_until_ready(out_nr)
    ref_nr = _reference(x, w_down, b_down, w_up, b_up, scale=0.1,
                        add_residual=False)
    assert jnp.allclose(out_nr, ref_nr, atol=1e-5, rtol=1e-5)

    # 3) Explicit separate residual.
    res_in = jax.random.normal(kres, (B, N, D), dtype=jnp.float32)
    out_sr = adapter_former_forward(x, w_down, b_down, w_up, b_up, scale=0.1,
                                    residual=res_in)
    out_sr = jax.block_until_ready(out_sr)
    ref_sr = _reference(x, w_down, b_down, w_up, b_up, scale=0.1,
                        residual=res_in)
    assert jnp.allclose(out_sr, ref_sr, atol=1e-5, rtol=1e-5)

    # 4) bf16 activations: exercises the bf16 MXU / bf16-epilogue path.
    x_bf = x.astype(jnp.bfloat16)
    out_bf = adapter_former_forward(x_bf, w_down, b_down, w_up, b_up, scale=0.1)
    out_bf = jax.block_until_ready(out_bf)
    assert out_bf.dtype == jnp.bfloat16 and out_bf.shape == (B, N, D)
    assert bool(jnp.all(jnp.isfinite(out_bf.astype(jnp.float32))))

    print("KERNEL_OK")
</pallas_src>

<mosaic_0001>
module attributes {stable_mosaic.version = 11 : i64} {
  func.func @_adapter_kernel_fused(%arg0: i32, %arg1: memref<8x128xf32, #tpu.memory_space<vmem>>, %arg2: memref<128x64xf32, #tpu.memory_space<vmem>>, %arg3: memref<1x64xf32, #tpu.memory_space<vmem>>, %arg4: memref<64x128xf32, #tpu.memory_space<vmem>>, %arg5: memref<1x128xf32, #tpu.memory_space<vmem>>, %arg6: memref<8x128xf32, #tpu.memory_space<vmem>>) attributes {dimension_semantics = [#tpu.dimension_semantics<parallel>], iteration_bounds = array<i64: 2>, scalar_prefetch = 0 : i64, scratch_operands = 0 : i64, tpu.core_type = #tpu.core_type<tc>, window_params = [{transform_indices = @transform_0, window_bounds = array<i64: 8, 128>}, {pipeline_mode = #tpu.pipeline_mode<synchronous>, transform_indices = @transform_1, window_bounds = array<i64: 128, 64>}, {pipeline_mode = #tpu.pipeline_mode<synchronous>, transform_indices = @transform_2, window_bounds = array<i64: 1, 64>}, {pipeline_mode = #tpu.pipeline_mode<synchronous>, transform_indices = @transform_3, window_bounds = array<i64: 64, 128>}, {pipeline_mode = #tpu.pipeline_mode<synchronous>, transform_indices = @transform_4, window_bounds = array<i64: 1, 128>}, {transform_indices = @transform_5, window_bounds = array<i64: 8, 128>}]} {
    %c0 = arith.constant 0 : index
    %c0_0 = arith.constant 0 : index
    %0 = vector.load %arg1[%c0, %c0_0] : memref<8x128xf32, #tpu.memory_space<vmem>>, vector<8x128xf32>
    %c0_1 = arith.constant 0 : index
    %c0_2 = arith.constant 0 : index
    %1 = vector.load %arg2[%c0_1, %c0_2] : memref<128x64xf32, #tpu.memory_space<vmem>>, vector<128x64xf32>
    %cst = arith.constant dense<0.000000e+00> : vector<8x64xf32>
    %2 = tpu.matmul %0, %1, %cst {dimension_numbers = #tpu.dot_dimension_numbers<[1], [0], [0], [1], [0, 0, 1, 1], [], []>} : vector<8x128xf32>, vector<128x64xf32>, vector<8x64xf32> -> vector<8x64xf32>
    %c0_3 = arith.constant 0 : index
    %c0_4 = arith.constant 0 : index
    %3 = vector.load %arg3[%c0_3, %c0_4] : memref<1x64xf32, #tpu.memory_space<vmem>>, vector<1x64xf32>
    %4 = vector.broadcast %3 : vector<1x64xf32> to vector<8x64xf32>
    %5 = arith.addf %2, %4 : vector<8x64xf32>
    %cst_5 = arith.constant 0.000000e+00 : f32
    %6 = vector.broadcast %cst_5 : f32 to vector<8x64xf32>
    %7 = arith.maximumf %5, %6 : vector<8x64xf32>
    %c0_6 = arith.constant 0 : index
    %c0_7 = arith.constant 0 : index
    %8 = vector.load %arg4[%c0_6, %c0_7] : memref<64x128xf32, #tpu.memory_space<vmem>>, vector<64x128xf32>
    %cst_8 = arith.constant dense<0.000000e+00> : vector<8x128xf32>
    %9 = tpu.matmul %7, %8, %cst_8 {dimension_numbers = #tpu.dot_dimension_numbers<[1], [0], [0], [1], [0, 0, 1, 1], [], []>} : vector<8x64xf32>, vector<64x128xf32>, vector<8x128xf32> -> vector<8x128xf32>
    %c0_9 = arith.constant 0 : index
    %c0_10 = arith.constant 0 : index
    %10 = vector.load %arg5[%c0_9, %c0_10] : memref<1x128xf32, #tpu.memory_space<vmem>>, vector<1x128xf32>
    %11 = vector.broadcast %10 : vector<1x128xf32> to vector<8x128xf32>
    %12 = arith.addf %9, %11 : vector<8x128xf32>
    %cst_11 = arith.constant 1.000000e-01 : f32
    %13 = vector.broadcast %cst_11 : f32 to vector<8x128xf32>
    %14 = arith.mulf %12, %13 : vector<8x128xf32>
    %15 = arith.addf %14, %0 : vector<8x128xf32>
    %c0_12 = arith.constant 0 : index
    %c0_13 = arith.constant 0 : index
    %16 = vector.load %arg6[%c0_12, %c0_13] : memref<8x128xf32, #tpu.memory_space<vmem>>, vector<8x128xf32>
    tpu.vector_store %arg6[%c0_12, %c0_13], %15 {strides = array<i32>} : memref<8x128xf32, #tpu.memory_space<vmem>>, vector<8x128xf32>,
    return
  }
  func.func @transform_0(%arg0: i32) -> (i32, i32) {
    %c0_i32 = arith.constant 0 : i32
    %c0_i32_0 = arith.constant 0 : i32
    return %arg0, %c0_i32 : i32, i32
  }
  func.func @transform_1(%arg0: i32) -> (i32, i32) {
    %c0_i32 = arith.constant 0 : i32
    %c0_i32_0 = arith.constant 0 : i32
    %c0_i32_1 = arith.constant 0 : i32
    return %c0_i32, %c0_i32_0 : i32, i32
  }
  func.func @transform_2(%arg0: i32) -> (i32, i32) {
    %c0_i32 = arith.constant 0 : i32
    %c0_i32_0 = arith.constant 0 : i32
    %c0_i32_1 = arith.constant 0 : i32
    return %c0_i32, %c0_i32_0 : i32, i32
  }
  func.func @transform_3(%arg0: i32) -> (i32, i32) {
    %c0_i32 = arith.constant 0 : i32
    %c0_i32_0 = arith.constant 0 : i32
    %c0_i32_1 = arith.constant 0 : i32
    return %c0_i32, %c0_i32_0 : i32, i32
  }
  func.func @transform_4(%arg0: i32) -> (i32, i32) {
    %c0_i32 = arith.constant 0 : i32
    %c0_i32_0 = arith.constant 0 : i32
    %c0_i32_1 = arith.constant 0 : i32
    return %c0_i32, %c0_i32_0 : i32, i32
  }
  func.func @transform_5(%arg0: i32) -> (i32, i32) {
    %c0_i32 = arith.constant 0 : i32
    %c0_i32_0 = arith.constant 0 : i32
    return %arg0, %c0_i32 : i32, i32
  }
}

module attributes {stable_mosaic.version = 11 : i64} {
  func.func @_adapter_kernel_fused(%arg0: i32, %arg1: memref<8x128xf32, #tpu.memory_space<vmem>>, %arg2: memref<128x64xf32, #tpu.memory_space<vmem>>, %arg3: memref<1x64xf32, #tpu.memory_space<vmem>>, %arg4: memref<64x128xf32, #tpu.memory_space<vmem>>, %arg5: memref<1x128xf32, #tpu.memory_space<vmem>>, %arg6: memref<8x128xf32, #tpu.memory_space<vmem>>) attributes {dimension_semantics = [#tpu.dimension_semantics<parallel>], iteration_bounds = array<i64: 2>, scalar_prefetch = 0 : i64, scratch_operands = 0 : i64, tpu.core_type = #tpu.core_type<tc>, window_params = [{transform_indices = @transform_0, window_bounds = array<i64: 8, 128>}, {pipeline_mode = #tpu.pipeline_mode<synchronous>, transform_indices = @transform_1, window_bounds = array<i64: 128, 64>}, {pipeline_mode = #tpu.pipeline_mode<synchronous>, transform_indices = @transform_2, window_bounds = array<i64: 1, 64>}, {pipeline_mode = #tpu.pipeline_mode<synchronous>, transform_indices = @transform_3, window_bounds = array<i64: 64, 128>}, {pipeline_mode = #tpu.pipeline_mode<synchronous>, transform_indices = @transform_4, window_bounds = array<i64: 1, 128>}, {transform_indices = @transform_5, window_bounds = array<i64: 8, 128>}]} {
    %c0 = arith.constant 0 : index
    %c0_0 = arith.constant 0 : index
    %0 = vector.load %arg1[%c0, %c0_0] : memref<8x128xf32, #tpu.memory_space<vmem>>, vector<8x128xf32>
    %c0_1 = arith.constant 0 : index
    %c0_2 = arith.constant 0 : index
    %1 = vector.load %arg2[%c0_1, %c0_2] : memref<128x64xf32, #tpu.memory_space<vmem>>, vector<128x64xf32>
    %cst = arith.constant dense<0.000000e+00> : vector<8x64xf32>
    %2 = tpu.matmul %0, %1, %cst {dimension_numbers = #tpu.dot_dimension_numbers<[1], [0], [0], [1], [0, 0, 1, 1], [], []>} : vector<8x128xf32>, vector<128x64xf32>, vector<8x64xf32> -> vector<8x64xf32>
    %c0_3 = arith.constant 0 : index
    %c0_4 = arith.constant 0 : index
    %3 = vector.load %arg3[%c0_3, %c0_4] : memref<1x64xf32, #tpu.memory_space<vmem>>, vector<1x64xf32>
    %4 = vector.broadcast %3 : vector<1x64xf32> to vector<8x64xf32>
    %5 = arith.addf %2, %4 : vector<8x64xf32>
    %cst_5 = arith.constant 0.000000e+00 : f32
    %6 = vector.broadcast %cst_5 : f32 to vector<8x64xf32>
    %7 = arith.maximumf %5, %6 : vector<8x64xf32>
    %c0_6 = arith.constant 0 : index
    %c0_7 = arith.constant 0 : index
    %8 = vector.load %arg4[%c0_6, %c0_7] : memref<64x128xf32, #tpu.memory_space<vmem>>, vector<64x128xf32>
    %cst_8 = arith.constant dense<0.000000e+00> : vector<8x128xf32>
    %9 = tpu.matmul %7, %8, %cst_8 {dimension_numbers = #tpu.dot_dimension_numbers<[1], [0], [0], [1], [0, 0, 1, 1], [], []>} : vector<8x64xf32>, vector<64x128xf32>, vector<8x128xf32> -> vector<8x128xf32>
    %c0_9 = arith.constant 0 : index
    %c0_10 = arith.constant 0 : index
    %10 = vector.load %arg5[%c0_9, %c0_10] : memref<1x128xf32, #tpu.memory_space<vmem>>, vector<1x128xf32>
    %11 = vector.broadcast %10 : vector<1x128xf32> to vector<8x128xf32>
    %12 = arith.addf %9, %11 : vector<8x128xf32>
    %cst_11 = arith.constant 1.000000e-01 : f32
    %13 = vector.broadcast %cst_11 : f32 to vector<8x128xf32>
    %14 = arith.mulf %12, %13 : vector<8x128xf32>
    %15 = arith.addf %14, %0 : vector<8x128xf32>
    %c0_12 = arith.constant 0 : index
    %c0_13 = arith.constant 0 : index
    %16 = vector.load %arg6[%c0_12, %c0_13] : memref<8x128xf32, #tpu.memory_space<vmem>>, vector<8x128xf32>
    tpu.vector_store %arg6[%c0_12, %c0_13], %15 {strides = array<i32>} : memref<8x128xf32, #tpu.memory_space<vmem>>, vector<8x128xf32>,
    return
  }
  func.func @transform_0(%arg0: i32) -> (i32, i32) {
    %c0_i32 = arith.constant 0 : i32
    %c0_i32_0 = arith.constant 0 : i32
    return %arg0, %c0_i32 : i32, i32
  }
  func.func @transform_1(%arg0: i32) -> (i32, i32) {
    %c0_i32 = arith.constant 0 : i32
    %c0_i32_0 = arith.constant 0 : i32
    %c0_i32_1 = arith.constant 0 : i32
    return %c0_i32, %c0_i32_0 : i32, i32
  }
  func.func @transform_2(%arg0: i32) -> (i32, i32) {
    %c0_i32 = arith.constant 0 : i32
    %c0_i32_0 = arith.constant 0 : i32
    %c0_i32_1 = arith.constant 0 : i32
    return %c0_i32, %c0_i32_0 : i32, i32
  }
  func.func @transform_3(%arg0: i32) -> (i32, i32) {
    %c0_i32 = arith.constant 0 : i32
    %c0_i32_0 = arith.constant 0 : i32
    %c0_i32_1 = arith.constant 0 : i32
    return %c0_i32, %c0_i32_0 : i32, i32
  }
  func.func @transform_4(%arg0: i32) -> (i32, i32) {
    %c0_i32 = arith.constant 0 : i32
    %c0_i32_0 = arith.constant 0 : i32
    %c0_i32_1 = arith.constant 0 : i32
    return %c0_i32, %c0_i32_0 : i32, i32
  }
  func.func @transform_5(%arg0: i32) -> (i32, i32) {
    %c0_i32 = arith.constant 0 : i32
    %c0_i32_0 = arith.constant 0 : i32
    return %arg0, %c0_i32 : i32, i32
  }
}

</mosaic_0001>

<llo_original>
// kernel: tpu_custom_call.1
$region0: #{tpu_custom_call.1}
  #allocation0 [shape = 'u32[]', space=smem, size = 0x4, offset = 0x4, fixed_abs, tag = 'smem constant byte address 0x4 - core index']
  #allocation1 [shape = 'u32[144,128]{1,0:T(1,128)}', space=vmem, size = 0x12000, scoped, tag = 'internal scratch']
  %s0 = inlined_call_operand.vmem [shape: f32[16,128], index: 0, kind: input, shape index: {}]
  %s1 = inlined_call_operand.vmem [shape: f32[128,64], index: 1, kind: input, shape index: {}]
  %s2 = inlined_call_operand.vmem [shape: f32[1,64], index: 2, kind: input, shape index: {}]
  %s3 = inlined_call_operand.vmem [shape: f32[64,128], index: 3, kind: input, shape index: {}]
  %s4 = inlined_call_operand.vmem [shape: f32[1,128], index: 4, kind: input, shape index: {}]
  %s5 = inlined_call_operand.hbm [shape: f32[16,128], index: 5, kind: output, shape index: {}]
  %s6 = sld [smem:[#allocation0]]
  $region53: #{tpu_custom_call.1} parent=0
    _
  %s8 = ssub.s32 1, %s6
  %s9 = scalar_select 0, %s8, %s6
  $region1: #{tpu_custom_call.1} parent=0
    #allocation2 [shape = 'u8[8192]{0}', space=vmem, size = 0x2000, scoped, tag = 'output window, operand 0']
    #allocation3 [shape = 's32[2]{0}', space=sflag, size = 0x8, scoped, tag = 'scoped memory for tpu_custom_call.1']
    %10 = vsyncpa [#allocation3], 0
    %s11 = scalar_lea.sflag [#allocation3], 1
    %12 = vsyncpa %s11, 0
    loop: start=0, step=1, limit=4
    $region2: #{tpu_custom_call.1} parent=1 // loop_pre_header
      _
    $region3: #{tpu_custom_call.1} parent=1 // loop_header
      %s14 = sphi 0, %s18
      %p15 = scmp.ge.s32.totalorder %s14, 4
      %s24 = sphi 0, %s26
      %s27 = sphi 0, %s24
      %s28 = sphi 0, %s27
      %s44 = sphi 0, %s28
      %s48 = sphi 0, %s48
      %s50 = sphi 0, %s48
      %s51 = sphi 0, %s50
      %s65 = sphi 0, %s51
      %s69 = sphi 0, %s69
      %s71 = sphi 0, %s69
      %s72 = sphi 0, %s71
      %s86 = sphi 0, %s72
      %s90 = sphi 0, %s90
      %s92 = sphi 0, %s90
      %s93 = sphi 0, %s92
      %s107 = sphi 0, %s93
      %s111 = sphi 0, %s111
      %s113 = sphi 0, %s111
      %s114 = sphi 0, %s113
      %s128 = sphi 0, %s114
      %s134 = sphi 0, %s136
      %s137 = sphi 0, %s134
      %s138 = sphi 0, %s137
      %s154 = sphi 0, %s138
    $region4: #{tpu_custom_call.1} parent=1 // loop_header_branch
      %17 = sbr.rel (%p15) target = $region8
    $region5: #{tpu_custom_call.1} parent=1 // loop_body
      %s19 = ssub.s32 %s14, 1
      %s20 = ssub.s32 %s14, 2
      %s21 = sadd.s32 %s14, 1
      %s22 = ssub.s32 %s14, %s21
      %p23 = scmp.eq.s32.totalorder %s22, 0
      %s25 = sadd.s32 %s24, 1
      %s26 = scalar_select %p23, %s24, %s25
      %p29 = pneg %p23
      %p30 = scmp.eq.s32.totalorder %s14, 1
      %p31 = por %p29, %p30
      %p32 = scmp.ne.s32.totalorder %s24, %s27
      %p33 = scmp.eq.s32.totalorder %s14, 0
      %p34 = por %p32, %p33
      %p35 = scmp.ne.s32.totalorder %s24, %s27
      %p36 = scmp.eq.s32.totalorder %s19, 1
      %p37 = por %p35, %p36
      %p38 = scmp.ne.s32.totalorder %s27, %s28
      %p39 = scmp.eq.s32.totalorder %s19, 0
      %p40 = por %p38, %p39
      %p41 = scmp.ne.s32.totalorder %s27, %s28
      %p42 = scmp.eq.s32.totalorder %s20, 1
      %p43 = por %p41, %p42
      %p45 = scmp.ne.s32.totalorder %s28, %s44
      %p46 = scmp.eq.s32.totalorder %s20, 0
      %p47 = por %p45, %p46
      %s49 = sadd.s32 %s48, 1
      %p52 = scmp.eq.s32.totalorder %s14, 1
      %p53 = scmp.ne.s32.totalorder %s48, %s50
      %p54 = scmp.eq.s32.totalorder %s14, 0
      %p55 = por %p53, %p54
      %p56 = scmp.ne.s32.totalorder %s48, %s50
      %p57 = scmp.eq.s32.totalorder %s19, 1
      %p58 = por %p56, %p57
      %p59 = scmp.ne.s32.totalorder %s50, %s51
      %p60 = scmp.eq.s32.totalorder %s19, 0
      %p61 = por %p59, %p60
      %p62 = scmp.ne.s32.totalorder %s50, %s51
      %p63 = scmp.eq.s32.totalorder %s20, 1
      %p64 = por %p62, %p63
      %p66 = scmp.ne.s32.totalorder %s51, %s65
      %p67 = scmp.eq.s32.totalorder %s20, 0
      %p68 = por %p66, %p67
      %s70 = sadd.s32 %s69, 1
      %p73 = scmp.eq.s32.totalorder %s14, 1
      %p74 = scmp.ne.s32.totalorder %s69, %s71
      %p75 = scmp.eq.s32.totalorder %s14, 0
      %p76 = por %p74, %p75
      %p77 = scmp.ne.s32.totalorder %s69, %s71
      %p78 = scmp.eq.s32.totalorder %s19, 1
      %p79 = por %p77, %p78
      %p80 = scmp.ne.s32.totalorder %s71, %s72
      %p81 = scmp.eq.s32.totalorder %s19, 0
      %p82 = por %p80, %p81
      %p83 = scmp.ne.s32.totalorder %s71, %s72
      %p84 = scmp.eq.s32.totalorder %s20, 1
      %p85 = por %p83, %p84
      %p87 = scmp.ne.s32.totalorder %s72, %s86
      %p88 = scmp.eq.s32.totalorder %s20, 0
      %p89 = por %p87, %p88
      %s91 = sadd.s32 %s90, 1
      %p94 = scmp.eq.s32.totalorder %s14, 1
      %p95 = scmp.ne.s32.totalorder %s90, %s92
      %p96 = scmp.eq.s32.totalorder %s14, 0
      %p97 = por %p95, %p96
      %p98 = scmp.ne.s32.totalorder %s90, %s92
      %p99 = scmp.eq.s32.totalorder %s19, 1
      %p100 = por %p98, %p99
      %p101 = scmp.ne.s32.totalorder %s92, %s93
      %p102 = scmp.eq.s32.totalorder %s19, 0
      %p103 = por %p101, %p102
      %p104 = scmp.ne.s32.totalorder %s92, %s93
      %p105 = scmp.eq.s32.totalorder %s20, 1
      %p106 = por %p104, %p105
      %p108 = scmp.ne.s32.totalorder %s93, %s107
      %p109 = scmp.eq.s32.totalorder %s20, 0
      %p110 = por %p108, %p109
      %s112 = sadd.s32 %s111, 1
      %p115 = scmp.eq.s32.totalorder %s14, 1
      %p116 = scmp.ne.s32.totalorder %s111, %s113
      %p117 = scmp.eq.s32.totalorder %s14, 0
      %p118 = por %p116, %p117
      %p119 = scmp.ne.s32.totalorder %s111, %s113
      %p120 = scmp.eq.s32.totalorder %s19, 1
      %p121 = por %p119, %p120
      %p122 = scmp.ne.s32.totalorder %s113, %s114
      %p123 = scmp.eq.s32.totalorder %s19, 0
      %p124 = por %p122, %p123
      %p125 = scmp.ne.s32.totalorder %s113, %s114
      %p126 = scmp.eq.s32.totalorder %s20, 1
      %p127 = por %p125, %p126
      %p129 = scmp.ne.s32.totalorder %s114, %s128
      %p130 = scmp.eq.s32.totalorder %s20, 0
      %p131 = por %p129, %p130
      %s132 = ssub.s32 %s14, %s21
      %p133 = scmp.eq.s32.totalorder %s132, 0
      %s135 = sadd.s32 %s134, 1
      %s136 = scalar_select %p133, %s134, %s135
      %p139 = pneg %p133
      %p140 = scmp.eq.s32.totalorder %s14, 1
      %p141 = por %p139, %p140
      %p142 = scmp.ne.s32.totalorder %s134, %s137
      %p143 = scmp.eq.s32.totalorder %s14, 0
      %p144 = por %p142, %p143
      %p145 = scmp.ne.s32.totalorder %s134, %s137
      %p146 = scmp.eq.s32.totalorder %s19, 1
      %p147 = por %p145, %p146
      %p148 = scmp.ne.s32.totalorder %s137, %s138
      %p149 = scmp.eq.s32.totalorder %s19, 0
      %p150 = por %p148, %p149
      %p151 = scmp.ne.s32.totalorder %s137, %s138
      %p152 = scmp.eq.s32.totalorder %s20, 1
      %p153 = por %p151, %p152
      %p155 = scmp.ne.s32.totalorder %s138, %s154
      %p156 = scmp.eq.s32.totalorder %s20, 0
      %p157 = por %p155, %p156
      %p158 = scmp.le.s32.totalorder 1, %s14
      %p159 = scmp.lt.s32.totalorder %s14, 3
      %p160 = pnand %p158, %p159
      %p161 = pneg %p160
      // Predicated region
      $region9: #{tpu_custom_call.1} parent=5 // pred_check
        _
      $region10: #{tpu_custom_call.1} parent=5 // pred_check_branch
        %163 = sbr.rel (%p160) target = $region12
      $region11: #{tpu_custom_call.1} parent=5 // pred_region
        %s164 = ssub.s32 %s14, 1
        // Predicated region
        $region13: #{tpu_custom_call.1} parent=11 // pred_check
          %p165 = pneg %p61
        $region14: #{tpu_custom_call.1} parent=11 // pred_check_branch
          %167 = sbr.rel (%p165) target = $region16
        $region15: #{tpu_custom_call.1} parent=11 // pred_region
          _
        $region16: #{tpu_custom_call.1} parent=11 // pred_fallthru
          _
        // Predicated region
        $region17: #{tpu_custom_call.1} parent=11 // pred_check
          %p168 = pneg %p82
        $region18: #{tpu_custom_call.1} parent=11 // pred_check_branch
          %170 = sbr.rel (%p168) target = $region20
        $region19: #{tpu_custom_call.1} parent=11 // pred_region
          _
        $region20: #{tpu_custom_call.1} parent=11 // pred_fallthru
          _
        // Predicated region
        $region21: #{tpu_custom_call.1} parent=11 // pred_check
          %p171 = pneg %p103
        $region22: #{tpu_custom_call.1} parent=11 // pred_check_branch
          %173 = sbr.rel (%p171) target = $region24
        $region23: #{tpu_custom_call.1} parent=11 // pred_region
          _
        $region24: #{tpu_custom_call.1} parent=11 // pred_fallthru
          _
        // Predicated region
        $region25: #{tpu_custom_call.1} parent=11 // pred_check
          %p174 = pneg %p124
        $region26: #{tpu_custom_call.1} parent=11 // pred_check_branch
          %176 = sbr.rel (%p174) target = $region28
        $region27: #{tpu_custom_call.1} parent=11 // pred_region
          _
        $region28: #{tpu_custom_call.1} parent=11 // pred_fallthru
          _
      $region12: #{tpu_custom_call.1} parent=5 // pred_fallthru
        _
      %p177 = scmp.lt.s32.totalorder %s14, 2
      // Predicated region
      $region29: #{tpu_custom_call.1} parent=5 // pred_check
        %p178 = pneg %p177
      $region30: #{tpu_custom_call.1} parent=5 // pred_check_branch
        %180 = sbr.rel (%p178) target = $region32
      $region31: #{tpu_custom_call.1} parent=5 // pred_region
        // Predicated region
        $region33: #{tpu_custom_call.1} parent=31 // pred_check
          %p181 = pneg %p34
        $region34: #{tpu_custom_call.1} parent=31 // pred_check_branch
          %183 = sbr.rel (%p181) target = $region36
        $region35: #{tpu_custom_call.1} parent=31 // pred_region
          %p184 = scmp.lt.s32.totalorder %s14, 1
          %s185 = scalar_select %p184, %s14, 1
          %s186 = smul.addr %s185, 8
          %s187 = scalar_lea.vmem %s0, %s186
        $region36: #{tpu_custom_call.1} parent=31 // pred_fallthru
          _
      $region32: #{tpu_custom_call.1} parent=5 // pred_fallthru
        _
      %p188 = scmp.le.s32.totalorder 1, %s14
      %p189 = scmp.lt.s32.totalorder %s14, 3
      %p190 = pnand %p188, %p189
      %p191 = pneg %p190
      // Predicated region
      $region37: #{tpu_custom_call.1} parent=5 // pred_check
        _
      $region38: #{tpu_custom_call.1} parent=5 // pred_check_branch
        %193 = sbr.rel (%p190) target = $region40
      $region39: #{tpu_custom_call.1} parent=5 // pred_region
        %s194 = ssub.s32 %s14, 1
        %p195 = scmp.lt.s32.totalorder %s19, 1
        %s196 = scalar_select %p195, %s19, 1
        %s197 = smul.addr %s196, 8
        %s198 = scalar_lea.vmem %s0, %s197
        %p199 = pneg %p40
        %p200 = pneg %p37
        %p201 = pneg %p61
        %p202 = pneg %p58
        %p203 = pneg %p82
        %p204 = pneg %p79
        %p205 = pneg %p103
        %p206 = pneg %p100
        %p207 = pneg %p124
        %p208 = pneg %p121
        %p209 = pneg %p150
        %p210 = pneg %p147
        %s211 = sand.u32 %s137, 1
        %s212 = scalar_lea.sflag [#allocation3], %s211
        %s213 = sand.u32 %s137, 1
        %s214 = smul.addr %s213, 8
        %s215 = scalar_lea.vmem [#allocation2], %s214
        %p216 = scmp.lt.s32.totalorder %s19, 1
        %s217 = scalar_select %p216, %s19, 1
        %s218 = smul.addr %s217, 8
        %s219 = scalar_lea.vmem %s0, %s218
        %v220 = vld [vmem:[%s219] sm:$0xff]
        %v221 = vld [vmem:[%s1] sm:$0xff]
        %v222 = vld [vmem:[%s1 + $0x8] sm:$0xff]
        %v223 = vld [vmem:[%s1 + $0x10] sm:$0xff]
        %v224 = vld [vmem:[%s1 + $0x18] sm:$0xff]
        %v225 = vld [vmem:[%s1 + $0x20] sm:$0xff]
        %v226 = vld [vmem:[%s1 + $0x28] sm:$0xff]
        %v227 = vld [vmem:[%s1 + $0x30] sm:$0xff]
        %v228 = vld [vmem:[%s1 + $0x38] sm:$0xff]
        %v229 = vld [vmem:[%s1 + $0x40] sm:$0xff]
        %v230 = vld [vmem:[%s1 + $0x48] sm:$0xff]
        %v231 = vld [vmem:[%s1 + $0x50] sm:$0xff]
        %v232 = vld [vmem:[%s1 + $0x58] sm:$0xff]
        %v233 = vld [vmem:[%s1 + $0x60] sm:$0xff]
        %v234 = vld [vmem:[%s1 + $0x68] sm:$0xff]
        %v235 = vld [vmem:[%s1 + $0x70] sm:$0xff]
        %v236 = vld [vmem:[%s1 + $0x78] sm:$0xff]
        %v237 = vld [vmem:[%s2] sm:$0x1]
        %v239 = vlaneseq
        %v240 = vshrl.u32 %v239, 7
        %v241 = vsub.s32 0, %v240
        %v242 = vrot.slane %v237, %v241
        %244 = vmatprep.subr.mxu0 0.0
        %245 = vmatpush1.msra.mxu0 %v221
        %246 = vmatprep.subr.mxu0 0.0
        %247 = vmatpush1.msra.mxu0 %v222
        %248 = vmatprep.subr.mxu0 0.0
        %249 = vmatpush1.msra.mxu0 %v223
        %250 = vmatprep.subr.mxu0 0.0
        %251 = vmatpush1.msra.mxu0 %v224
        %252 = vmatprep.subr.mxu0 0.0
        %253 = vmatpush1.msra.mxu0 %v225
        %254 = vmatprep.subr.mxu0 0.0
        %255 = vmatpush1.msra.mxu0 %v226
        %256 = vmatprep.subr.mxu0 0.0
        %257 = vmatpush1.msra.mxu0 %v227
        %258 = vmatprep.subr.mxu0 0.0
        %259 = vmatpush1.msra.mxu0 %v228
        %260 = vmatprep.subr.mxu0 0.0
        %261 = vmatpush1.msra.mxu0 %v229
        %262 = vmatprep.subr.mxu0 0.0
        %263 = vmatpush1.msra.mxu0 %v230
        %264 = vmatprep.subr.mxu0 0.0
        %265 = vmatpush1.msra.mxu0 %v231
        %266 = vmatprep.subr.mxu0 0.0
        %267 = vmatpush1.msra.mxu0 %v232
        %268 = vmatprep.subr.mxu0 0.0
        %269 = vmatpush1.msra.mxu0 %v233
        %270 = vmatprep.subr.mxu0 0.0
        %271 = vmatpush1.msra.mxu0 %v234
        %272 = vmatprep.subr.mxu0 0.0
        %273 = vmatpush1.msra.mxu0 %v235
        %274 = vmatprep.subr.mxu0 0.0
        %275 = vmatpush1.msra.mxu0 %v236
        %276 = vmatprep.subr.mxu0 0.0
        %277 = vmatpush1.msra.mxu0 0.0
        %278 = vmatprep.subr.mxu0 0.0
        %279 = vmatpush1.msra.mxu0 0.0
        %280 = vmatprep.subr.mxu0 0.0
        %281 = vmatpush1.msra.mxu0 0.0
        %282 = vmatprep.subr.mxu0 0.0
        %283 = vmatpush1.msra.mxu0 0.0
        %284 = vmatprep.subr.mxu0 0.0
        %285 = vmatpush1.msra.mxu0 0.0
        %286 = vmatprep.subr.mxu0 0.0
        %287 = vmatpush1.msra.mxu0 0.0
        %288 = vmatprep.subr.mxu0 0.0
        %289 = vmatpush1.msra.mxu0 0.0
        %290 = vmatprep.subr.mxu0 0.0
        %291 = vmatpush1.msra.mxu0 0.0
        %292 = vmatprep.subr.mxu0 0.0
        %293 = vmatpush1.msra.mxu0 0.0
        %294 = vmatprep.subr.mxu0 0.0
        %295 = vmatpush1.msra.mxu0 0.0
        %296 = vmatprep.subr.mxu0 0.0
        %297 = vmatpush1.msra.mxu0 0.0
        %298 = vmatprep.subr.mxu0 0.0
        %299 = vmatpush1.msra.mxu0 0.0
        %300 = vmatprep.subr.mxu0 0.0
        %301 = vmatpush1.msra.mxu0 0.0
        %302 = vmatprep.subr.mxu0 0.0
        %303 = vmatpush1.msra.mxu0 0.0
        %304 = vmatprep.subr.mxu0 0.0
        %305 = vmatpush1.msra.mxu0 0.0
        %306 = vmatprep.subr.mxu0 0.0
        %307 = vmatpush1.msra.mxu0 0.0
        %308 = vmatprep.mubr.f32.mxu0 0.0
        %309 = vmatmul.mubr.f32.gmra.mrb[0].mxu0 %v220
        %v310 = vpop.f32.mrb[0].mxu0
        %v311 = vadd.f32 %v242, %v310
        %v312 = vpop.f32.mrb[0].mxu0
        %313 = vdwg.mxu0
        %v314 = vmax.f32 %v311, 0.0
        %v315 = vld [vmem:[%s3] sm:$0xff]
        %v316 = vld [vmem:[%s3 + $0x8] sm:$0xff]
        %v317 = vld [vmem:[%s3 + $0x10] sm:$0xff]
        %v318 = vld [vmem:[%s3 + $0x18] sm:$0xff]
        %v319 = vld [vmem:[%s3 + $0x20] sm:$0xff]
        %v320 = vld [vmem:[%s3 + $0x28] sm:$0xff]
        %v321 = vld [vmem:[%s3 + $0x30] sm:$0xff]
        %v322 = vld [vmem:[%s3 + $0x38] sm:$0xff]
        %v323 = vld [vmem:[%s4] sm:$0x1]
        %v325 = vlaneseq
        %v326 = vshrl.u32 %v325, 7
        %v327 = vsub.s32 0, %v326
        %v328 = vrot.slane %v323, %v327
        %vm330 = vcmask 523264
        %v332 = vsel %vm330, %v314, 0
        %334 = vmatprep.subr.mxu0 0.0
        %335 = vmatpush1.msra.mxu0 %v315
        %336 = vmatprep.subr.mxu0 0.0
        %337 = vmatpush1.msra.mxu0 %v316
        %338 = vmatprep.subr.mxu0 0.0
        %339 = vmatpush1.msra.mxu0 %v317
        %340 = vmatprep.subr.mxu0 0.0
        %341 = vmatpush1.msra.mxu0 %v318
        %342 = vmatprep.subr.mxu0 0.0
        %343 = vmatpush1.msra.mxu0 %v319
        %344 = vmatprep.subr.mxu0 0.0
        %345 = vmatpush1.msra.mxu0 %v320
        %346 = vmatprep.subr.mxu0 0.0
        %347 = vmatpush1.msra.mxu0 %v321
        %348 = vmatprep.subr.mxu0 0.0
        %349 = vmatpush1.msra.mxu0 %v322
        %350 = vmatprep.subr.mxu0 0.0
        %351 = vmatpush1.msra.mxu0 0.0
        %352 = vmatprep.subr.mxu0 0.0
        %353 = vmatpush1.msra.mxu0 0.0
        %354 = vmatprep.subr.mxu0 0.0
        %355 = vmatpush1.msra.mxu0 0.0
        %356 = vmatprep.subr.mxu0 0.0
        %357 = vmatpush1.msra.mxu0 0.0
        %358 = vmatprep.subr.mxu0 0.0
        %359 = vmatpush1.msra.mxu0 0.0
        %360 = vmatprep.subr.mxu0 0.0
        %361 = vmatpush1.msra.mxu0 0.0
        %362 = vmatprep.subr.mxu0 0.0
        %363 = vmatpush1.msra.mxu0 0.0
        %364 = vmatprep.subr.mxu0 0.0
        %365 = vmatpush1.msra.mxu0 0.0
        %366 = vmatprep.subr.mxu0 0.0
        %367 = vmatpush1.msra.mxu0 0.0
        %368 = vmatprep.subr.mxu0 0.0
        %369 = vmatpush1.msra.mxu0 0.0
        %370 = vmatprep.subr.mxu0 0.0
        %371 = vmatpush1.msra.mxu0 0.0
        %372 = vmatprep.subr.mxu0 0.0
        %373 = vmatpush1.msra.mxu0 0.0
        %374 = vmatprep.subr.mxu0 0.0
        %375 = vmatpush1.msra.mxu0 0.0
        %376 = vmatprep.subr.mxu0 0.0
        %377 = vmatpush1.msra.mxu0 0.0
        %378 = vmatprep.subr.mxu0 0.0
        %379 = vmatpush1.msra.mxu0 0.0
        %380 = vmatprep.subr.mxu0 0.0
        %381 = vmatpush1.msra.mxu0 0.0
        %382 = vmatprep.subr.mxu0 0.0
        %383 = vmatpush1.msra.mxu0 0.0
        %384 = vmatprep.subr.mxu0 0.0
        %385 = vmatpush1.msra.mxu0 0.0
        %386 = vmatprep.subr.mxu0 0.0
        %387 = vmatpush1.msra.mxu0 0.0
        %388 = vmatprep.subr.mxu0 0.0
        %389 = vmatpush1.msra.mxu0 0.0
        %390 = vmatprep.subr.mxu0 0.0
        %391 = vmatpush1.msra.mxu0 0.0
        %392 = vmatprep.subr.mxu0 0.0
        %393 = vmatpush1.msra.mxu0 0.0
        %394 = vmatprep.subr.mxu0 0.0
        %395 = vmatpush1.msra.mxu0 0.0
        %396 = vmatprep.subr.mxu0 0.0
        %397 = vmatpush1.msra.mxu0 0.0
        %398 = vmatprep.mubr.f32.mxu0 0.0
        %399 = vmatmul.mubr.f32.gmra.mrb[0].mxu0 %v332
        %v400 = vpop.f32.mrb[0].mxu0
        %v401 = vadd.f32 %v328, %v400
        %v402 = vpop.f32.mrb[0].mxu0
        %403 = vdwg.mxu0
        %v404 = vmul.f32 %v401, 0.1
        %v405 = vadd.f32 %v404, %v220
        %406 = vst [vmem:[%s215] sm:$0xff] %v405
        %s407 = sand.u32 %s137, 1
        %s408 = scalar_lea.sflag [#allocation3], %s407
        %s409 = sand.u32 %s137, 1
        %s410 = smul.addr %s409, 8
        %s411 = scalar_lea.vmem [#allocation2], %s410
        // Predicated region
        $region41: #{tpu_custom_call.1} parent=39 // pred_check
          %p412 = pneg %p147
        $region42: #{tpu_custom_call.1} parent=39 // pred_check_branch
          %414 = sbr.rel (%p412) target = $region44
        $region43: #{tpu_custom_call.1} parent=39 // pred_region
          %s416 = ssub.s32 128, 128
          %417 = vsyncadd %s408, %s416
          %s418 = smul.addr %s19, 128
          %s419 = scalar_lea.hbm %s5, %s418
          %s421 = sshll.u32 %s411, 4
          %s422 = int_to_ptr.vmem [resolvable:$true] %s421
          %424 = dma.vmem_to_hbm [thread:$0]  %s422, 128, %s419, %s408
        $region44: #{tpu_custom_call.1} parent=39 // pred_fallthru
          _
      $region40: #{tpu_custom_call.1} parent=5 // pred_fallthru
        _
      %p425 = scmp.le.s32.totalorder 2, %s14
      // Predicated region
      $region45: #{tpu_custom_call.1} parent=5 // pred_check
        %p426 = pneg %p425
      $region46: #{tpu_custom_call.1} parent=5 // pred_check_branch
        %428 = sbr.rel (%p426) target = $region48
      $region47: #{tpu_custom_call.1} parent=5 // pred_region
        %s429 = ssub.s32 %s14, 2
        // Predicated region
        $region49: #{tpu_custom_call.1} parent=47 // pred_check
          %p430 = pneg %p153
        $region50: #{tpu_custom_call.1} parent=47 // pred_check_branch
          %432 = sbr.rel (%p430) target = $region52
        $region51: #{tpu_custom_call.1} parent=47 // pred_region
          %s433 = sand.u32 %s138, 1
          %s434 = scalar_lea.sflag [#allocation3], %s433
          %s435 = sand.u32 %s138, 1
          %s436 = smul.addr %s435, 8
          %s437 = scalar_lea.vmem [#allocation2], %s436
          %438 = dma.done %s434, 128
        $region52: #{tpu_custom_call.1} parent=47 // pred_fallthru
          _
      $region48: #{tpu_custom_call.1} parent=5 // pred_fallthru
        _
    $region6: #{tpu_custom_call.1} parent=1 // loop_footer
      %s18 = sadd.s32 1, %s14
    $region7: #{tpu_custom_call.1} parent=1 // loop_footer_branch
      %13 = sbr.rel target = $region3
    $region8: #{tpu_custom_call.1} parent=1 // loop_exit
      _
    %439 = vsyncpa [#allocation3], 1
    %s440 = scalar_lea.sflag [#allocation3], 1
    %441 = vsyncpa %s440, 1

// kernel: tpu_custom_call.1
$region0: #{tpu_custom_call.1}
  #allocation0 [shape = 'u32[]', space=smem, size = 0x4, offset = 0x4, fixed_abs, tag = 'smem constant byte address 0x4 - core index']
  #allocation1 [shape = 'u32[144,128]{1,0:T(1,128)}', space=vmem, size = 0x12000, scoped, tag = 'internal scratch']
  %s0 = inlined_call_operand.vmem [shape: f32[16,128], index: 0, kind: input, shape index: {}]
  %s1 = inlined_call_operand.vmem [shape: f32[128,64], index: 1, kind: input, shape index: {}]
  %s2 = inlined_call_operand.vmem [shape: f32[1,64], index: 2, kind: input, shape index: {}]
  %s3 = inlined_call_operand.vmem [shape: f32[64,128], index: 3, kind: input, shape index: {}]
  %s4 = inlined_call_operand.vmem [shape: f32[1,128], index: 4, kind: input, shape index: {}]
  %s5 = inlined_call_operand.hbm [shape: f32[16,128], index: 5, kind: output, shape index: {}]
  %s6 = sld [smem:[#allocation0]]
  $region53: #{tpu_custom_call.1} parent=0
    _
  %s8 = ssub.s32 1, %s6
  %s9 = scalar_select 0, %s8, %s6
  $region1: #{tpu_custom_call.1} parent=0
    #allocation2 [shape = 'u8[8192]{0}', space=vmem, size = 0x2000, scoped, tag = 'output window, operand 0']
    #allocation3 [shape = 's32[2]{0}', space=sflag, size = 0x8, scoped, tag = 'scoped memory for tpu_custom_call.1']
    %10 = vsyncpa [#allocation3], 0
    %s11 = scalar_lea.sflag [#allocation3], 1
    %12 = vsyncpa %s11, 0
    loop: start=0, step=1, limit=4
    $region2: #{tpu_custom_call.1} parent=1 // loop_pre_header
      _
    $region3: #{tpu_custom_call.1} parent=1 // loop_header
      %s14 = sphi 0, %s18
      %p15 = scmp.ge.s32.totalorder %s14, 4
      %s24 = sphi 0, %s26
      %s27 = sphi 0, %s24
      %s28 = sphi 0, %s27
      %s44 = sphi 0, %s28
      %s48 = sphi 0, %s48
      %s50 = sphi 0, %s48
      %s51 = sphi 0, %s50
      %s65 = sphi 0, %s51
      %s69 = sphi 0, %s69
      %s71 = sphi 0, %s69
      %s72 = sphi 0, %s71
      %s86 = sphi 0, %s72
      %s90 = sphi 0, %s90
      %s92 = sphi 0, %s90
      %s93 = sphi 0, %s92
      %s107 = sphi 0, %s93
      %s111 = sphi 0, %s111
      %s113 = sphi 0, %s111
      %s114 = sphi 0, %s113
      %s128 = sphi 0, %s114
      %s134 = sphi 0, %s136
      %s137 = sphi 0, %s134
      %s138 = sphi 0, %s137
      %s154 = sphi 0, %s138
    $region4: #{tpu_custom_call.1} parent=1 // loop_header_branch
      %17 = sbr.rel (%p15) target = $region8
    $region5: #{tpu_custom_call.1} parent=1 // loop_body
      %s19 = ssub.s32 %s14, 1
      %s20 = ssub.s32 %s14, 2
      %s21 = sadd.s32 %s14, 1
      %s22 = ssub.s32 %s14, %s21
      %p23 = scmp.eq.s32.totalorder %s22, 0
      %s25 = sadd.s32 %s24, 1
      %s26 = scalar_select %p23, %s24, %s25
      %p29 = pneg %p23
      %p30 = scmp.eq.s32.totalorder %s14, 1
      %p31 = por %p29, %p30
      %p32 = scmp.ne.s32.totalorder %s24, %s27
      %p33 = scmp.eq.s32.totalorder %s14, 0
      %p34 = por %p32, %p33
      %p35 = scmp.ne.s32.totalorder %s24, %s27
      %p36 = scmp.eq.s32.totalorder %s19, 1
      %p37 = por %p35, %p36
      %p38 = scmp.ne.s32.totalorder %s27, %s28
      %p39 = scmp.eq.s32.totalorder %s19, 0
      %p40 = por %p38, %p39
      %p41 = scmp.ne.s32.totalorder %s27, %s28
      %p42 = scmp.eq.s32.totalorder %s20, 1
      %p43 = por %p41, %p42
      %p45 = scmp.ne.s32.totalorder %s28, %s44
      %p46 = scmp.eq.s32.totalorder %s20, 0
      %p47 = por %p45, %p46
      %s49 = sadd.s32 %s48, 1
      %p52 = scmp.eq.s32.totalorder %s14, 1
      %p53 = scmp.ne.s32.totalorder %s48, %s50
      %p54 = scmp.eq.s32.totalorder %s14, 0
      %p55 = por %p53, %p54
      %p56 = scmp.ne.s32.totalorder %s48, %s50
      %p57 = scmp.eq.s32.totalorder %s19, 1
      %p58 = por %p56, %p57
      %p59 = scmp.ne.s32.totalorder %s50, %s51
      %p60 = scmp.eq.s32.totalorder %s19, 0
      %p61 = por %p59, %p60
      %p62 = scmp.ne.s32.totalorder %s50, %s51
      %p63 = scmp.eq.s32.totalorder %s20, 1
      %p64 = por %p62, %p63
      %p66 = scmp.ne.s32.totalorder %s51, %s65
      %p67 = scmp.eq.s32.totalorder %s20, 0
      %p68 = por %p66, %p67
      %s70 = sadd.s32 %s69, 1
      %p73 = scmp.eq.s32.totalorder %s14, 1
      %p74 = scmp.ne.s32.totalorder %s69, %s71
      %p75 = scmp.eq.s32.totalorder %s14, 0
      %p76 = por %p74, %p75
      %p77 = scmp.ne.s32.totalorder %s69, %s71
      %p78 = scmp.eq.s32.totalorder %s19, 1
      %p79 = por %p77, %p78
      %p80 = scmp.ne.s32.totalorder %s71, %s72
      %p81 = scmp.eq.s32.totalorder %s19, 0
      %p82 = por %p80, %p81
      %p83 = scmp.ne.s32.totalorder %s71, %s72
      %p84 = scmp.eq.s32.totalorder %s20, 1
      %p85 = por %p83, %p84
      %p87 = scmp.ne.s32.totalorder %s72, %s86
      %p88 = scmp.eq.s32.totalorder %s20, 0
      %p89 = por %p87, %p88
      %s91 = sadd.s32 %s90, 1
      %p94 = scmp.eq.s32.totalorder %s14, 1
      %p95 = scmp.ne.s32.totalorder %s90, %s92
      %p96 = scmp.eq.s32.totalorder %s14, 0
      %p97 = por %p95, %p96
      %p98 = scmp.ne.s32.totalorder %s90, %s92
      %p99 = scmp.eq.s32.totalorder %s19, 1
      %p100 = por %p98, %p99
      %p101 = scmp.ne.s32.totalorder %s92, %s93
      %p102 = scmp.eq.s32.totalorder %s19, 0
      %p103 = por %p101, %p102
      %p104 = scmp.ne.s32.totalorder %s92, %s93
      %p105 = scmp.eq.s32.totalorder %s20, 1
      %p106 = por %p104, %p105
      %p108 = scmp.ne.s32.totalorder %s93, %s107
      %p109 = scmp.eq.s32.totalorder %s20, 0
      %p110 = por %p108, %p109
      %s112 = sadd.s32 %s111, 1
      %p115 = scmp.eq.s32.totalorder %s14, 1
      %p116 = scmp.ne.s32.totalorder %s111, %s113
      %p117 = scmp.eq.s32.totalorder %s14, 0
      %p118 = por %p116, %p117
      %p119 = scmp.ne.s32.totalorder %s111, %s113
      %p120 = scmp.eq.s32.totalorder %s19, 1
      %p121 = por %p119, %p120
      %p122 = scmp.ne.s32.totalorder %s113, %s114
      %p123 = scmp.eq.s32.totalorder %s19, 0
      %p124 = por %p122, %p123
      %p125 = scmp.ne.s32.totalorder %s113, %s114
      %p126 = scmp.eq.s32.totalorder %s20, 1
      %p127 = por %p125, %p126
      %p129 = scmp.ne.s32.totalorder %s114, %s128
      %p130 = scmp.eq.s32.totalorder %s20, 0
      %p131 = por %p129, %p130
      %s132 = ssub.s32 %s14, %s21
      %p133 = scmp.eq.s32.totalorder %s132, 0
      %s135 = sadd.s32 %s134, 1
      %s136 = scalar_select %p133, %s134, %s135
      %p139 = pneg %p133
      %p140 = scmp.eq.s32.totalorder %s14, 1
      %p141 = por %p139, %p140
      %p142 = scmp.ne.s32.totalorder %s134, %s137
      %p143 = scmp.eq.s32.totalorder %s14, 0
      %p144 = por %p142, %p143
      %p145 = scmp.ne.s32.totalorder %s134, %s137
      %p146 = scmp.eq.s32.totalorder %s19, 1
      %p147 = por %p145, %p146
      %p148 = scmp.ne.s32.totalorder %s137, %s138
      %p149 = scmp.eq.s32.totalorder %s19, 0
      %p150 = por %p148, %p149
      %p151 = scmp.ne.s32.totalorder %s137, %s138
      %p152 = scmp.eq.s32.totalorder %s20, 1
      %p153 = por %p151, %p152
      %p155 = scmp.ne.s32.totalorder %s138, %s154
      %p156 = scmp.eq.s32.totalorder %s20, 0
      %p157 = por %p155, %p156
      %p158 = scmp.le.s32.totalorder 1, %s14
      %p159 = scmp.lt.s32.totalorder %s14, 3
      %p160 = pnand %p158, %p159
      %p161 = pneg %p160
      // Predicated region
      $region9: #{tpu_custom_call.1} parent=5 // pred_check
        _
      $region10: #{tpu_custom_call.1} parent=5 // pred_check_branch
        %163 = sbr.rel (%p160) target = $region12
      $region11: #{tpu_custom_call.1} parent=5 // pred_region
        %s164 = ssub.s32 %s14, 1
        // Predicated region
        $region13: #{tpu_custom_call.1} parent=11 // pred_check
          %p165 = pneg %p61
        $region14: #{tpu_custom_call.1} parent=11 // pred_check_branch
          %167 = sbr.rel (%p165) target = $region16
        $region15: #{tpu_custom_call.1} parent=11 // pred_region
          _
        $region16: #{tpu_custom_call.1} parent=11 // pred_fallthru
          _
        // Predicated region
        $region17: #{tpu_custom_call.1} parent=11 // pred_check
          %p168 = pneg %p82
        $region18: #{tpu_custom_call.1} parent=11 // pred_check_branch
          %170 = sbr.rel (%p168) target = $region20
        $region19: #{tpu_custom_call.1} parent=11 // pred_region
          _
        $region20: #{tpu_custom_call.1} parent=11 // pred_fallthru
          _
        // Predicated region
        $region21: #{tpu_custom_call.1} parent=11 // pred_check
          %p171 = pneg %p103
        $region22: #{tpu_custom_call.1} parent=11 // pred_check_branch
          %173 = sbr.rel (%p171) target = $region24
        $region23: #{tpu_custom_call.1} parent=11 // pred_region
          _
        $region24: #{tpu_custom_call.1} parent=11 // pred_fallthru
          _
        // Predicated region
        $region25: #{tpu_custom_call.1} parent=11 // pred_check
          %p174 = pneg %p124
        $region26: #{tpu_custom_call.1} parent=11 // pred_check_branch
          %176 = sbr.rel (%p174) target = $region28
        $region27: #{tpu_custom_call.1} parent=11 // pred_region
          _
        $region28: #{tpu_custom_call.1} parent=11 // pred_fallthru
          _
      $region12: #{tpu_custom_call.1} parent=5 // pred_fallthru
        _
      %p177 = scmp.lt.s32.totalorder %s14, 2
      // Predicated region
      $region29: #{tpu_custom_call.1} parent=5 // pred_check
        %p178 = pneg %p177
      $region30: #{tpu_custom_call.1} parent=5 // pred_check_branch
        %180 = sbr.rel (%p178) target = $region32
      $region31: #{tpu_custom_call.1} parent=5 // pred_region
        // Predicated region
        $region33: #{tpu_custom_call.1} parent=31 // pred_check
          %p181 = pneg %p34
        $region34: #{tpu_custom_call.1} parent=31 // pred_check_branch
          %183 = sbr.rel (%p181) target = $region36
        $region35: #{tpu_custom_call.1} parent=31 // pred_region
          %p184 = scmp.lt.s32.totalorder %s14, 1
          %s185 = scalar_select %p184, %s14, 1
          %s186 = smul.addr %s185, 8
          %s187 = scalar_lea.vmem %s0, %s186
        $region36: #{tpu_custom_call.1} parent=31 // pred_fallthru
          _
      $region32: #{tpu_custom_call.1} parent=5 // pred_fallthru
        _
      %p188 = scmp.le.s32.totalorder 1, %s14
      %p189 = scmp.lt.s32.totalorder %s14, 3
      %p190 = pnand %p188, %p189
      %p191 = pneg %p190
      // Predicated region
      $region37: #{tpu_custom_call.1} parent=5 // pred_check
        _
      $region38: #{tpu_custom_call.1} parent=5 // pred_check_branch
        %193 = sbr.rel (%p190) target = $region40
      $region39: #{tpu_custom_call.1} parent=5 // pred_region
        %s194 = ssub.s32 %s14, 1
        %p195 = scmp.lt.s32.totalorder %s19, 1
        %s196 = scalar_select %p195, %s19, 1
        %s197 = smul.addr %s196, 8
        %s198 = scalar_lea.vmem %s0, %s197
        %p199 = pneg %p40
        %p200 = pneg %p37
        %p201 = pneg %p61
        %p202 = pneg %p58
        %p203 = pneg %p82
        %p204 = pneg %p79
        %p205 = pneg %p103
        %p206 = pneg %p100
        %p207 = pneg %p124
        %p208 = pneg %p121
        %p209 = pneg %p150
        %p210 = pneg %p147
        %s211 = sand.u32 %s137, 1
        %s212 = scalar_lea.sflag [#allocation3], %s211
        %s213 = sand.u32 %s137, 1
        %s214 = smul.addr %s213, 8
        %s215 = scalar_lea.vmem [#allocation2], %s214
        %p216 = scmp.lt.s32.totalorder %s19, 1
        %s217 = scalar_select %p216, %s19, 1
        %s218 = smul.addr %s217, 8
        %s219 = scalar_lea.vmem %s0, %s218
        %v220 = vld [vmem:[%s219] sm:$0xff]
        %v221 = vld [vmem:[%s1] sm:$0xff]
        %v222 = vld [vmem:[%s1 + $0x8] sm:$0xff]
        %v223 = vld [vmem:[%s1 + $0x10] sm:$0xff]
        %v224 = vld [vmem:[%s1 + $0x18] sm:$0xff]
        %v225 = vld [vmem:[%s1 + $0x20] sm:$0xff]
        %v226 = vld [vmem:[%s1 + $0x28] sm:$0xff]
        %v227 = vld [vmem:[%s1 + $0x30] sm:$0xff]
        %v228 = vld [vmem:[%s1 + $0x38] sm:$0xff]
        %v229 = vld [vmem:[%s1 + $0x40] sm:$0xff]
        %v230 = vld [vmem:[%s1 + $0x48] sm:$0xff]
        %v231 = vld [vmem:[%s1 + $0x50] sm:$0xff]
        %v232 = vld [vmem:[%s1 + $0x58] sm:$0xff]
        %v233 = vld [vmem:[%s1 + $0x60] sm:$0xff]
        %v234 = vld [vmem:[%s1 + $0x68] sm:$0xff]
        %v235 = vld [vmem:[%s1 + $0x70] sm:$0xff]
        %v236 = vld [vmem:[%s1 + $0x78] sm:$0xff]
        %v237 = vld [vmem:[%s2] sm:$0x1]
        %v239 = vlaneseq
        %v240 = vshrl.u32 %v239, 7
        %v241 = vsub.s32 0, %v240
        %v242 = vrot.slane %v237, %v241
        %244 = vmatprep.subr.mxu0 0.0
        %245 = vmatpush1.msra.mxu0 %v221
        %246 = vmatprep.subr.mxu0 0.0
        %247 = vmatpush1.msra.mxu0 %v222
        %248 = vmatprep.subr.mxu0 0.0
        %249 = vmatpush1.msra.mxu0 %v223
        %250 = vmatprep.subr.mxu0 0.0
        %251 = vmatpush1.msra.mxu0 %v224
        %252 = vmatprep.subr.mxu0 0.0
        %253 = vmatpush1.msra.mxu0 %v225
        %254 = vmatprep.subr.mxu0 0.0
        %255 = vmatpush1.msra.mxu0 %v226
        %256 = vmatprep.subr.mxu0 0.0
        %257 = vmatpush1.msra.mxu0 %v227
        %258 = vmatprep.subr.mxu0 0.0
        %259 = vmatpush1.msra.mxu0 %v228
        %260 = vmatprep.subr.mxu0 0.0
        %261 = vmatpush1.msra.mxu0 %v229
        %262 = vmatprep.subr.mxu0 0.0
        %263 = vmatpush1.msra.mxu0 %v230
        %264 = vmatprep.subr.mxu0 0.0
        %265 = vmatpush1.msra.mxu0 %v231
        %266 = vmatprep.subr.mxu0 0.0
        %267 = vmatpush1.msra.mxu0 %v232
        %268 = vmatprep.subr.mxu0 0.0
        %269 = vmatpush1.msra.mxu0 %v233
        %270 = vmatprep.subr.mxu0 0.0
        %271 = vmatpush1.msra.mxu0 %v234
        %272 = vmatprep.subr.mxu0 0.0
        %273 = vmatpush1.msra.mxu0 %v235
        %274 = vmatprep.subr.mxu0 0.0
        %275 = vmatpush1.msra.mxu0 %v236
        %276 = vmatprep.subr.mxu0 0.0
        %277 = vmatpush1.msra.mxu0 0.0
        %278 = vmatprep.subr.mxu0 0.0
        %279 = vmatpush1.msra.mxu0 0.0
        %280 = vmatprep.subr.mxu0 0.0
        %281 = vmatpush1.msra.mxu0 0.0
        %282 = vmatprep.subr.mxu0 0.0
        %283 = vmatpush1.msra.mxu0 0.0
        %284 = vmatprep.subr.mxu0 0.0
        %285 = vmatpush1.msra.mxu0 0.0
        %286 = vmatprep.subr.mxu0 0.0
        %287 = vmatpush1.msra.mxu0 0.0
        %288 = vmatprep.subr.mxu0 0.0
        %289 = vmatpush1.msra.mxu0 0.0
        %290 = vmatprep.subr.mxu0 0.0
        %291 = vmatpush1.msra.mxu0 0.0
        %292 = vmatprep.subr.mxu0 0.0
        %293 = vmatpush1.msra.mxu0 0.0
        %294 = vmatprep.subr.mxu0 0.0
        %295 = vmatpush1.msra.mxu0 0.0
        %296 = vmatprep.subr.mxu0 0.0
        %297 = vmatpush1.msra.mxu0 0.0
        %298 = vmatprep.subr.mxu0 0.0
        %299 = vmatpush1.msra.mxu0 0.0
        %300 = vmatprep.subr.mxu0 0.0
        %301 = vmatpush1.msra.mxu0 0.0
        %302 = vmatprep.subr.mxu0 0.0
        %303 = vmatpush1.msra.mxu0 0.0
        %304 = vmatprep.subr.mxu0 0.0
        %305 = vmatpush1.msra.mxu0 0.0
        %306 = vmatprep.subr.mxu0 0.0
        %307 = vmatpush1.msra.mxu0 0.0
        %308 = vmatprep.mubr.f32.mxu0 0.0
        %309 = vmatmul.mubr.f32.gmra.mrb[0].mxu0 %v220
        %v310 = vpop.f32.mrb[0].mxu0
        %v311 = vadd.f32 %v242, %v310
        %v312 = vpop.f32.mrb[0].mxu0
        %313 = vdwg.mxu0
        %v314 = vmax.f32 %v311, 0.0
        %v315 = vld [vmem:[%s3] sm:$0xff]
        %v316 = vld [vmem:[%s3 + $0x8] sm:$0xff]
        %v317 = vld [vmem:[%s3 + $0x10] sm:$0xff]
        %v318 = vld [vmem:[%s3 + $0x18] sm:$0xff]
        %v319 = vld [vmem:[%s3 + $0x20] sm:$0xff]
        %v320 = vld [vmem:[%s3 + $0x28] sm:$0xff]
        %v321 = vld [vmem:[%s3 + $0x30] sm:$0xff]
        %v322 = vld [vmem:[%s3 + $0x38] sm:$0xff]
        %v323 = vld [vmem:[%s4] sm:$0x1]
        %v325 = vlaneseq
        %v326 = vshrl.u32 %v325, 7
        %v327 = vsub.s32 0, %v326
        %v328 = vrot.slane %v323, %v327
        %vm330 = vcmask 523264
        %v332 = vsel %vm330, %v314, 0
        %334 = vmatprep.subr.mxu0 0.0
        %335 = vmatpush1.msra.mxu0 %v315
        %336 = vmatprep.subr.mxu0 0.0
        %337 = vmatpush1.msra.mxu0 %v316
        %338 = vmatprep.subr.mxu0 0.0
        %339 = vmatpush1.msra.mxu0 %v317
        %340 = vmatprep.subr.mxu0 0.0
        %341 = vmatpush1.msra.mxu0 %v318
        %342 = vmatprep.subr.mxu0 0.0
        %343 = vmatpush1.msra.mxu0 %v319
        %344 = vmatprep.subr.mxu0 0.0
        %345 = vmatpush1.msra.mxu0 %v320
        %346 = vmatprep.subr.mxu0 0.0
        %347 = vmatpush1.msra.mxu0 %v321
        %348 = vmatprep.subr.mxu0 0.0
        %349 = vmatpush1.msra.mxu0 %v322
        %350 = vmatprep.subr.mxu0 0.0
        %351 = vmatpush1.msra.mxu0 0.0
        %352 = vmatprep.subr.mxu0 0.0
        %353 = vmatpush1.msra.mxu0 0.0
        %354 = vmatprep.subr.mxu0 0.0
        %355 = vmatpush1.msra.mxu0 0.0
        %356 = vmatprep.subr.mxu0 0.0
        %357 = vmatpush1.msra.mxu0 0.0
        %358 = vmatprep.subr.mxu0 0.0
        %359 = vmatpush1.msra.mxu0 0.0
        %360 = vmatprep.subr.mxu0 0.0
        %361 = vmatpush1.msra.mxu0 0.0
        %362 = vmatprep.subr.mxu0 0.0
        %363 = vmatpush1.msra.mxu0 0.0
        %364 = vmatprep.subr.mxu0 0.0
        %365 = vmatpush1.msra.mxu0 0.0
        %366 = vmatprep.subr.mxu0 0.0
        %367 = vmatpush1.msra.mxu0 0.0
        %368 = vmatprep.subr.mxu0 0.0
        %369 = vmatpush1.msra.mxu0 0.0
        %370 = vmatprep.subr.mxu0 0.0
        %371 = vmatpush1.msra.mxu0 0.0
        %372 = vmatprep.subr.mxu0 0.0
        %373 = vmatpush1.msra.mxu0 0.0
        %374 = vmatprep.subr.mxu0 0.0
        %375 = vmatpush1.msra.mxu0 0.0
        %376 = vmatprep.subr.mxu0 0.0
        %377 = vmatpush1.msra.mxu0 0.0
        %378 = vmatprep.subr.mxu0 0.0
        %379 = vmatpush1.msra.mxu0 0.0
        %380 = vmatprep.subr.mxu0 0.0
        %381 = vmatpush1.msra.mxu0 0.0
        %382 = vmatprep.subr.mxu0 0.0
        %383 = vmatpush1.msra.mxu0 0.0
        %384 = vmatprep.subr.mxu0 0.0
        %385 = vmatpush1.msra.mxu0 0.0
        %386 = vmatprep.subr.mxu0 0.0
        %387 = vmatpush1.msra.mxu0 0.0
        %388 = vmatprep.subr.mxu0 0.0
        %389 = vmatpush1.msra.mxu0 0.0
        %390 = vmatprep.subr.mxu0 0.0
        %391 = vmatpush1.msra.mxu0 0.0
        %392 = vmatprep.subr.mxu0 0.0
        %393 = vmatpush1.msra.mxu0 0.0
        %394 = vmatprep.subr.mxu0 0.0
        %395 = vmatpush1.msra.mxu0 0.0
        %396 = vmatprep.subr.mxu0 0.0
        %397 = vmatpush1.msra.mxu0 0.0
        %398 = vmatprep.mubr.f32.mxu0 0.0
        %399 = vmatmul.mubr.f32.gmra.mrb[0].mxu0 %v332
        %v400 = vpop.f32.mrb[0].mxu0
        %v401 = vadd.f32 %v328, %v400
        %v402 = vpop.f32.mrb[0].mxu0
        %403 = vdwg.mxu0
        %v404 = vmul.f32 %v401, 0.1
        %v405 = vadd.f32 %v404, %v220
        %406 = vst [vmem:[%s215] sm:$0xff] %v405
        %s407 = sand.u32 %s137, 1
        %s408 = scalar_lea.sflag [#allocation3], %s407
        %s409 = sand.u32 %s137, 1
        %s410 = smul.addr %s409, 8
        %s411 = scalar_lea.vmem [#allocation2], %s410
        // Predicated region
        $region41: #{tpu_custom_call.1} parent=39 // pred_check
          %p412 = pneg %p147
        $region42: #{tpu_custom_call.1} parent=39 // pred_check_branch
          %414 = sbr.rel (%p412) target = $region44
        $region43: #{tpu_custom_call.1} parent=39 // pred_region
          %s416 = ssub.s32 128, 128
          %417 = vsyncadd %s408, %s416
          %s418 = smul.addr %s19, 128
          %s419 = scalar_lea.hbm %s5, %s418
          %s421 = sshll.u32 %s411, 4
          %s422 = int_to_ptr.vmem [resolvable:$true] %s421
          %424 = dma.vmem_to_hbm [thread:$0]  %s422, 128, %s419, %s408
        $region44: #{tpu_custom_call.1} parent=39 // pred_fallthru
          _
      $region40: #{tpu_custom_call.1} parent=5 // pred_fallthru
        _
      %p425 = scmp.le.s32.totalorder 2, %s14
      // Predicated region
      $region45: #{tpu_custom_call.1} parent=5 // pred_check
        %p426 = pneg %p425
      $region46: #{tpu_custom_call.1} parent=5 // pred_check_branch
        %428 = sbr.rel (%p426) target = $region48
      $region47: #{tpu_custom_call.1} parent=5 // pred_region
        %s429 = ssub.s32 %s14, 2
        // Predicated region
        $region49: #{tpu_custom_call.1} parent=47 // pred_check
          %p430 = pneg %p153
        $region50: #{tpu_custom_call.1} parent=47 // pred_check_branch
          %432 = sbr.rel (%p430) target = $region52
        $region51: #{tpu_custom_call.1} parent=47 // pred_region
          %s433 = sand.u32 %s138, 1
          %s434 = scalar_lea.sflag [#allocation3], %s433
          %s435 = sand.u32 %s138, 1
          %s436 = smul.addr %s435, 8
          %s437 = scalar_lea.vmem [#allocation2], %s436
          %438 = dma.done %s434, 128
        $region52: #{tpu_custom_call.1} parent=47 // pred_fallthru
          _
      $region48: #{tpu_custom_call.1} parent=5 // pred_fallthru
        _
    $region6: #{tpu_custom_call.1} parent=1 // loop_footer
      %s18 = sadd.s32 1, %s14
    $region7: #{tpu_custom_call.1} parent=1 // loop_footer_branch
      %13 = sbr.rel target = $region3
    $region8: #{tpu_custom_call.1} parent=1 // loop_exit
      _
    %439 = vsyncpa [#allocation3], 1
    %s440 = scalar_lea.sflag [#allocation3], 1
    %441 = vsyncpa %s440, 1

</llo_original>
